<compile_context>
chip_gen: v5e
topology: v5e:2x2
jax: 0.10.0
libtpu: 0.0.40
codegen_flags: <defaults>
</compile_context>

<pallas_src>
import numpy as np
import jax
import jax.numpy as jnp
from jax.experimental import pallas as pl
from jax.experimental.pallas import tpu as pltpu


def _make_kernel(H):
    """Kernel closure over the (static) per-image height H."""

    def kernel(x_ref, w1_ref, w2_ref, b1_ref, scale_ref, shift_ref, o_ref):
        """
        x_ref     : (M, WC) f32   batch-stacked slab, row m = (n, h) = (m//H, m%H),
                                  element [m, w*C + c]
        w1_ref    : (3*WC, WC) bf16  conv1 band weights (kh taps stacked along K)
        w2_ref    : (3*WC, WC) bf16  conv2 band weights
        b1_ref    : (1, WC) f32   conv1 bias, replicated over w
        scale_ref : (1, WC) f32   folded batchnorm scale, replicated over w
        shift_ref : (1, WC) f32   folded batchnorm shift (conv2 bias included)
        o_ref     : (M, WC) f32   output slab
        """
        M = x_ref.shape[0]
        WC = x_ref.shape[1]
        x = x_ref[...]                                       # (M, WC) f32

        # Row-within-image index; masks kill both the H zero-padding and any
        # cross-image leakage from the circular rolls below.  Computed once,
        # reused by both convs.
        row = jax.lax.broadcasted_iota(jnp.int32, (M, WC), 0)
        h_in_img = row % H
        is_first = h_in_img == 0           # rows whose "h-1" tap is zero pad
        is_last = h_in_img == (H - 1)      # rows whose "h+1" tap is zero pad

        def conv3x3(y, w_ref):
            # up[m]   = y[m-1] (zero at h==0), down[m] = y[m+1] (zero at h==H-1)
            up = jnp.where(is_first, 0.0, pltpu.roll(y, 1, axis=0))
            down = jnp.where(is_last, 0.0, pltpu.roll(y, M - 1, axis=0))
            # K-concatenated LHS: [x(h-1) | x(h) | x(h+1)] -> one MXU matmul.
            lhs = jnp.concatenate([up, y, down], axis=1).astype(jnp.bfloat16)
            return jnp.dot(lhs, w_ref[...],
                           preferred_element_type=jnp.float32)   # (M, WC) f32

        # ---- conv1 + bias + ReLU (dropout == identity at inference) ----
        y1 = jnp.maximum(conv3x3(x, w1_ref) + b1_ref[...], 0.0)

        # ---- conv2 (bias folded into shift) ----
        z2 = conv3x3(y1, w2_ref)

        # ---- folded batchnorm + residual (all f32) ----
        o_ref[...] = (x + z2 * scale_ref[...] + shift_ref[...]).astype(o_ref.dtype)

    return kernel


def _pack_conv_weight(w_oihw, width):
    """(Cout, Cin, 3, 3) torch conv weight -> (3*W*Cin, W*Cout) bf16 band matrix.

    M[kh*W*Cin + w_in*Cin + ci, w_out*Cout + co] = w[co, ci, kh, (w_in - w_out) + 1]
    (zero when |w_in - w_out| > 1), so the W-direction taps and W zero-padding
    are absorbed into a single matmul, and the three kh taps are stacked along
    K to fuse the whole 3x3 conv into one MXU matmul.
    """
    w = np.asarray(w_oihw, dtype=np.float32)                 # (Cout, Cin, 3, 3)
    cout, cin = w.shape[0], w.shape[1]
    wcin, wcout = width * cin, width * cout
    m = np.zeros((3, wcin, wcout), np.float32)
    for kh in range(3):
        for kw in range(3):
            blk = w[:, :, kh, kw].T                          # (Cin, Cout)
            dw = kw - 1                                      # w_in - w_out
            for w_out in range(width):
                w_in = w_out + dw
                if 0 <= w_in < width:
                    m[kh,
                      w_in * cin:(w_in + 1) * cin,
                      w_out * cout:(w_out + 1) * cout] = blk
    return jnp.asarray(m.reshape(3 * wcin, wcout), dtype=jnp.bfloat16)


def resnet_layer_pallas(x_nchw, w1_oihw, b1, w2_oihw, b2,
                        gamma, beta, running_mean, running_var, eps=1e-5):
    N, C, H, W = x_nchw.shape
    WC = W * C
    M = N * H
    # Lane-density / band-matrix design assumption (see header note).
    assert WC % 128 == 0, "this kernel assumes W*C is a multiple of 128 lanes"

    # Lane-dense channel packing + batch stacking (wrapper-side layout only):
    # packed[n*H + h, w*C + c] = x[n, c, h, w].
    x_packed = jnp.transpose(x_nchw, (0, 2, 3, 1)).reshape(M, WC)

    w1_band = _pack_conv_weight(w1_oihw, W)                  # (3*WC, WC) bf16
    w2_band = _pack_conv_weight(w2_oihw, W)

    # Fold BN (eval mode) to scale/shift and fold conv2's bias into the shift.
    bn_scale = gamma / jnp.sqrt(running_var + eps)           # (C,)
    bn_shift = beta - running_mean * bn_scale
    shift_fused = bn_scale * b2 + bn_shift

    b1_packed = jnp.tile(b1, W).reshape(1, WC).astype(jnp.float32)
    scale_packed = jnp.tile(bn_scale, W).reshape(1, WC).astype(jnp.float32)
    shift_packed = jnp.tile(shift_fused, W).reshape(1, WC).astype(jnp.float32)

    out_packed = pl.pallas_call(
        _make_kernel(H),
        out_shape=jax.ShapeDtypeStruct((M, WC), x_packed.dtype),
        grid=(1,),                                           # single step
        in_specs=[
            pl.BlockSpec((M, WC), lambda i: (0, 0)),         # x (batch-stacked)
            pl.BlockSpec((3 * WC, WC), lambda i: (0, 0)),    # conv1 band weights
            pl.BlockSpec((3 * WC, WC), lambda i: (0, 0)),    # conv2 band weights
            pl.BlockSpec((1, WC), lambda i: (0, 0)),         # conv1 bias
            pl.BlockSpec((1, WC), lambda i: (0, 0)),         # bn scale
            pl.BlockSpec((1, WC), lambda i: (0, 0)),         # bn shift (+ conv2 bias)
        ],
        out_specs=pl.BlockSpec((M, WC), lambda i: (0, 0)),
        compiler_params=pltpu.CompilerParams(
            dimension_semantics=("arbitrary",)),
    )(x_packed, w1_band, w2_band, b1_packed, scale_packed, shift_packed)

    # Unpack back to NCHW (wrapper-side layout plumbing only).
    return jnp.transpose(out_packed.reshape(N, H, W, C), (0, 3, 1, 2))


# ---------------- pure-JAX reference (for correctness check) ----------------
def reference_nchw(x, w1, b1, w2, b2, gamma, beta, mean, var, eps=1e-5):
    def conv(y, w, b):
        out = jax.lax.conv_general_dilated(
            y, w, window_strides=(1, 1), padding=((1, 1), (1, 1)),
            dimension_numbers=("NCHW", "OIHW", "NCHW"))
        return out + b[None, :, None, None]
    y = jax.nn.relu(conv(x, w1, b1))
    y = conv(y, w2, b2)
    scale = gamma / jnp.sqrt(var + eps)
    shift = beta - mean * scale
    return x + y * scale[None, :, None, None] + shift[None, :, None, None]


if __name__ == "__main__":
    # Small shapes consistent with the module (nChannels = C); C*W = 128 lanes.
    N, C, H, W = 2, 8, 16, 16
    key = jax.random.PRNGKey(0)
    kx, kw1, kw2, kb1, kb2 = jax.random.split(key, 5)

    # Input (PyTorch layout NCHW).
    x_nchw = jax.random.normal(kx, (N, C, H, W), jnp.float32)

    # Xavier-normal conv weights (fan_in = fan_out = C*9), PyTorch (Cout,Cin,3,3).
    xavier_std = float(np.sqrt(2.0 / (C * 9 + C * 9)))
    w1 = jax.random.normal(kw1, (C, C, 3, 3), jnp.float32) * xavier_std
    w2 = jax.random.normal(kw2, (C, C, 3, 3), jnp.float32) * xavier_std
    # PyTorch conv bias default: U(-1/sqrt(fan_in), 1/sqrt(fan_in)), fan_in = C*9.
    bound = 1.0 / float(np.sqrt(C * 9))
    b1 = jax.random.uniform(kb1, (C,), jnp.float32, -bound, bound)
    b2 = jax.random.uniform(kb2, (C,), jnp.float32, -bound, bound)

    # BatchNorm2d (fresh module, eval mode).
    gamma = jnp.ones((C,), jnp.float32)
    beta = jnp.zeros((C,), jnp.float32)
    running_mean = jnp.zeros((C,), jnp.float32)
    running_var = jnp.ones((C,), jnp.float32)

    out = resnet_layer_pallas(x_nchw, w1, b1, w2, b2,
                              gamma, beta, running_mean, running_var)
    out = jax.block_until_ready(out)

    ref = jax.block_until_ready(
        reference_nchw(x_nchw, w1, b1, w2, b2,
                       gamma, beta, running_mean, running_var))
    # bf16 MXU operands (f32 accumulation) through two 3x3 convs -> loosened
    # tolerance vs the pure-f32 reference.
    np.testing.assert_allclose(np.asarray(out), np.asarray(ref),
                               rtol=5e-2, atol=5e-2)
    print("KERNEL_OK")
</pallas_src>

<mosaic_0001>
module attributes {stable_mosaic.version = 11 : i64} {
  func.func @kernel(%arg0: i32, %arg1: memref<32x128xf32, #tpu.memory_space<vmem>>, %arg2: memref<384x128xbf16, #tpu.memory_space<vmem>>, %arg3: memref<384x128xbf16, #tpu.memory_space<vmem>>, %arg4: memref<1x128xf32, #tpu.memory_space<vmem>>, %arg5: memref<1x128xf32, #tpu.memory_space<vmem>>, %arg6: memref<1x128xf32, #tpu.memory_space<vmem>>, %arg7: memref<32x128xf32, #tpu.memory_space<vmem>>) attributes {dimension_semantics = [#tpu.dimension_semantics<arbitrary>], iteration_bounds = array<i64: 1>, scalar_prefetch = 0 : i64, scratch_operands = 0 : i64, tpu.core_type = #tpu.core_type<tc>, window_params = [{pipeline_mode = #tpu.pipeline_mode<synchronous>, transform_indices = @transform_0, window_bounds = array<i64: 32, 128>}, {pipeline_mode = #tpu.pipeline_mode<synchronous>, transform_indices = @transform_1, window_bounds = array<i64: 384, 128>}, {pipeline_mode = #tpu.pipeline_mode<synchronous>, transform_indices = @transform_2, window_bounds = array<i64: 384, 128>}, {pipeline_mode = #tpu.pipeline_mode<synchronous>, transform_indices = @transform_3, window_bounds = array<i64: 1, 128>}, {pipeline_mode = #tpu.pipeline_mode<synchronous>, transform_indices = @transform_4, window_bounds = array<i64: 1, 128>}, {pipeline_mode = #tpu.pipeline_mode<synchronous>, transform_indices = @transform_5, window_bounds = array<i64: 1, 128>}, {pipeline_mode = #tpu.pipeline_mode<synchronous>, transform_indices = @transform_6, window_bounds = array<i64: 32, 128>}]} {
    %c0 = arith.constant 0 : index
    %c0_0 = arith.constant 0 : index
    %0 = vector.load %arg1[%c0, %c0_0] : memref<32x128xf32, #tpu.memory_space<vmem>>, vector<32x128xf32>
    %1 = tpu.iota {dimensions = array<i32: 0>} : vector<32x128xi32>
    %c16_i32 = arith.constant 16 : i32
    %c0_i32 = arith.constant 0 : i32
    %2 = arith.cmpi eq, %c16_i32, %c0_i32 : i32
    %c1_i32 = arith.constant 1 : i32
    %3 = arith.select %2, %c1_i32, %c16_i32 : i32
    %4 = vector.broadcast %3 : i32 to vector<32x128xi32>
    %5 = arith.remsi %1, %4 : vector<32x128xi32>
    %c0_i32_1 = arith.constant 0 : i32
    %6 = vector.broadcast %c0_i32_1 : i32 to vector<32x128xi32>
    %7 = arith.cmpi ne, %5, %6 : vector<32x128xi32>
    %c0_i32_2 = arith.constant 0 : i32
    %8 = vector.broadcast %c0_i32_2 : i32 to vector<32x128xi32>
    %9 = arith.cmpi slt, %5, %8 : vector<32x128xi32>
    %c0_i32_3 = arith.constant 0 : i32
    %10 = arith.cmpi slt, %3, %c0_i32_3 : i32
    %11 = vector.broadcast %10 : i1 to vector<32x128xi1>
    %12 = vector.broadcast %11 : vector<32x128xi1> to vector<32x128xi1>
    %13 = arith.xori %9, %12 : vector<32x128xi1>
    %14 = arith.andi %13, %7 : vector<32x128xi1>
    %15 = vector.broadcast %3 : i32 to vector<32x128xi32>
    %16 = arith.addi %5, %15 : vector<32x128xi32>
    %17 = arith.select %14, %16, %5 : vector<32x128xi1>, vector<32x128xi32>
    %c0_i32_4 = arith.constant 0 : i32
    %18 = vector.broadcast %c0_i32_4 : i32 to vector<32x128xi32>
    %19 = arith.cmpi eq, %17, %18 : vector<32x128xi32>
    %c15_i32 = arith.constant 15 : i32
    %20 = vector.broadcast %c15_i32 : i32 to vector<32x128xi32>
    %21 = arith.cmpi eq, %17, %20 : vector<32x128xi32>
    %c1_i32_5 = arith.constant 1 : i32
    %22 = tpu.dynamic_rotate %0 by %c1_i32_5 dim 0 : vector<32x128xf32>, i32 -> vector<32x128xf32>
    %cst = arith.constant 0.000000e+00 : f32
    %23 = vector.broadcast %cst : f32 to vector<32x128xf32>
    %24 = arith.select %19, %23, %22 : vector<32x128xi1>, vector<32x128xf32>
    %c31_i32 = arith.constant 31 : i32
    %25 = tpu.dynamic_rotate %0 by %c31_i32 dim 0 : vector<32x128xf32>, i32 -> vector<32x128xf32>
    %cst_6 = arith.constant 0.000000e+00 : f32
    %26 = vector.broadcast %cst_6 : f32 to vector<32x128xf32>
    %27 = arith.select %21, %26, %25 : vector<32x128xi1>, vector<32x128xf32>
    %28 = tpu.concatenate %24, %0, %27 in 1 : vector<32x128xf32>, vector<32x128xf32>, vector<32x128xf32> -> vector<32x384xf32>
    %29 = arith.truncf %28 : vector<32x384xf32> to vector<32x384xbf16>
    %c0_7 = arith.constant 0 : index
    %c0_8 = arith.constant 0 : index
    %30 = vector.load %arg2[%c0_7, %c0_8] : memref<384x128xbf16, #tpu.memory_space<vmem>>, vector<384x128xbf16>
    %cst_9 = arith.constant dense<0.000000e+00> : vector<32x128xf32>
    %31 = tpu.matmul %29, %30, %cst_9 {dimension_numbers = #tpu.dot_dimension_numbers<[1], [0], [0], [1], [0, 0, 1, 1], [], []>} : vector<32x384xbf16>, vector<384x128xbf16>, vector<32x128xf32> -> vector<32x128xf32>
    %c0_10 = arith.constant 0 : index
    %c0_11 = arith.constant 0 : index
    %32 = vector.load %arg4[%c0_10, %c0_11] : memref<1x128xf32, #tpu.memory_space<vmem>>, vector<1x128xf32>
    %33 = vector.broadcast %32 : vector<1x128xf32> to vector<32x128xf32>
    %34 = arith.addf %31, %33 : vector<32x128xf32>
    %cst_12 = arith.constant 0.000000e+00 : f32
    %35 = vector.broadcast %cst_12 : f32 to vector<32x128xf32>
    %36 = arith.maximumf %34, %35 : vector<32x128xf32>
    %c1_i32_13 = arith.constant 1 : i32
    %37 = tpu.dynamic_rotate %36 by %c1_i32_13 dim 0 : vector<32x128xf32>, i32 -> vector<32x128xf32>
    %cst_14 = arith.constant 0.000000e+00 : f32
    %38 = vector.broadcast %cst_14 : f32 to vector<32x128xf32>
    %39 = arith.select %19, %38, %37 : vector<32x128xi1>, vector<32x128xf32>
    %c31_i32_15 = arith.constant 31 : i32
    %40 = tpu.dynamic_rotate %36 by %c31_i32_15 dim 0 : vector<32x128xf32>, i32 -> vector<32x128xf32>
    %cst_16 = arith.constant 0.000000e+00 : f32
    %41 = vector.broadcast %cst_16 : f32 to vector<32x128xf32>
    %42 = arith.select %21, %41, %40 : vector<32x128xi1>, vector<32x128xf32>
    %43 = tpu.concatenate %39, %36, %42 in 1 : vector<32x128xf32>, vector<32x128xf32>, vector<32x128xf32> -> vector<32x384xf32>
    %44 = arith.truncf %43 : vector<32x384xf32> to vector<32x384xbf16>
    %c0_17 = arith.constant 0 : index
    %c0_18 = arith.constant 0 : index
    %45 = vector.load %arg3[%c0_17, %c0_18] : memref<384x128xbf16, #tpu.memory_space<vmem>>, vector<384x128xbf16>
    %cst_19 = arith.constant dense<0.000000e+00> : vector<32x128xf32>
    %46 = tpu.matmul %44, %45, %cst_19 {dimension_numbers = #tpu.dot_dimension_numbers<[1], [0], [0], [1], [0, 0, 1, 1], [], []>} : vector<32x384xbf16>, vector<384x128xbf16>, vector<32x128xf32> -> vector<32x128xf32>
    %c0_20 = arith.constant 0 : index
    %c0_21 = arith.constant 0 : index
    %47 = vector.load %arg5[%c0_20, %c0_21] : memref<1x128xf32, #tpu.memory_space<vmem>>, vector<1x128xf32>
    %48 = vector.broadcast %47 : vector<1x128xf32> to vector<32x128xf32>
    %49 = arith.mulf %46, %48 : vector<32x128xf32>
    %50 = arith.addf %0, %49 : vector<32x128xf32>
    %c0_22 = arith.constant 0 : index
    %c0_23 = arith.constant 0 : index
    %51 = vector.load %arg6[%c0_22, %c0_23] : memref<1x128xf32, #tpu.memory_space<vmem>>, vector<1x128xf32>
    %52 = vector.broadcast %51 : vector<1x128xf32> to vector<32x128xf32>
    %53 = arith.addf %50, %52 : vector<32x128xf32>
    %c0_24 = arith.constant 0 : index
    %c0_25 = arith.constant 0 : index
    %54 = vector.load %arg7[%c0_24, %c0_25] : memref<32x128xf32, #tpu.memory_space<vmem>>, vector<32x128xf32>
    tpu.vector_store %arg7[%c0_24, %c0_25], %53 {strides = array<i32>} : memref<32x128xf32, #tpu.memory_space<vmem>>, vector<32x128xf32>,
    return
  }
  func.func @transform_0(%arg0: i32) -> (i32, i32) {
    %c0_i32 = arith.constant 0 : i32
    %c0_i32_0 = arith.constant 0 : i32
    %c0_i32_1 = arith.constant 0 : i32
    return %c0_i32, %c0_i32_0 : i32, i32
  }
  func.func @transform_1(%arg0: i32) -> (i32, i32) {
    %c0_i32 = arith.constant 0 : i32
    %c0_i32_0 = arith.constant 0 : i32
    %c0_i32_1 = arith.constant 0 : i32
    return %c0_i32, %c0_i32_0 : i32, i32
  }
  func.func @transform_2(%arg0: i32) -> (i32, i32) {
    %c0_i32 = arith.constant 0 : i32
    %c0_i32_0 = arith.constant 0 : i32
    %c0_i32_1 = arith.constant 0 : i32
    return %c0_i32, %c0_i32_0 : i32, i32
  }
  func.func @transform_3(%arg0: i32) -> (i32, i32) {
    %c0_i32 = arith.constant 0 : i32
    %c0_i32_0 = arith.constant 0 : i32
    %c0_i32_1 = arith.constant 0 : i32
    return %c0_i32, %c0_i32_0 : i32, i32
  }
  func.func @transform_4(%arg0: i32) -> (i32, i32) {
    %c0_i32 = arith.constant 0 : i32
    %c0_i32_0 = arith.constant 0 : i32
    %c0_i32_1 = arith.constant 0 : i32
    return %c0_i32, %c0_i32_0 : i32, i32
  }
  func.func @transform_5(%arg0: i32) -> (i32, i32) {
    %c0_i32 = arith.constant 0 : i32
    %c0_i32_0 = arith.constant 0 : i32
    %c0_i32_1 = arith.constant 0 : i32
    return %c0_i32, %c0_i32_0 : i32, i32
  }
  func.func @transform_6(%arg0: i32) -> (i32, i32) {
    %c0_i32 = arith.constant 0 : i32
    %c0_i32_0 = arith.constant 0 : i32
    %c0_i32_1 = arith.constant 0 : i32
    return %c0_i32, %c0_i32_0 : i32, i32
  }
}

</mosaic_0001>

<llo_original>
// kernel: tpu_custom_call.1
$region0: #{tpu_custom_call.1}
  #allocation0 [shape = 'u32[]', space=smem, size = 0x4, offset = 0x4, fixed_abs, tag = 'smem constant byte address 0x4 - core index']
  #allocation1 [shape = 'u32[72,128]{1,0:T(1,128)}', space=vmem, size = 0x9000, scoped, tag = 'internal scratch']
  %s0 = inlined_call_operand.hbm [shape: f32[32,128], index: 0, kind: input, shape index: {}]
  %s1 = inlined_call_operand.hbm [shape: bf16[384,128], index: 1, kind: input, shape index: {}]
  %s2 = inlined_call_operand.hbm [shape: bf16[384,128], index: 2, kind: input, shape index: {}]
  %s3 = inlined_call_operand.vmem [shape: f32[1,128], index: 3, kind: input, shape index: {}]
  %s4 = inlined_call_operand.vmem [shape: f32[1,128], index: 4, kind: input, shape index: {}]
  %s5 = inlined_call_operand.vmem [shape: f32[1,128], index: 5, kind: input, shape index: {}]
  %s6 = inlined_call_operand.hbm [shape: f32[32,128], index: 6, kind: output, shape index: {}]
  %s7 = sld [smem:[#allocation0]]
  $region46: #{tpu_custom_call.1} parent=0
    _
  %s9 = ssub.s32 1, %s7
  %s10 = scalar_select 0, %s9, %s7
  $region1: #{tpu_custom_call.1} parent=0
    #allocation2 [shape = 'u8[16384]{0}', space=vmem, size = 0x4000, scoped, tag = 'input window, operand 0, single buffered']
    #allocation3 [shape = 's32[1]{0}', space=sflag, size = 0x4, scoped, tag = 'scoped memory for tpu_custom_call.1']
    #allocation4 [shape = 's32[1]{0}', space=sflag, size = 0x4, scoped, tag = 'scoped memory for tpu_custom_call.1']
    #allocation5 [shape = 'u8[98304]{0}', space=vmem, size = 0x18000, scoped, tag = 'input window, operand 1, single buffered']
    #allocation6 [shape = 's32[1]{0}', space=sflag, size = 0x4, scoped, tag = 'scoped memory for tpu_custom_call.1']
    #allocation7 [shape = 'u8[98304]{0}', space=vmem, size = 0x18000, scoped, tag = 'input window, operand 2, single buffered']
    #allocation8 [shape = 'u8[16384]{0}', space=vmem, size = 0x4000, scoped, tag = 'output window, operand 0, single buffered']
    %11 = vsyncpa [#allocation3], 0
    %12 = vsyncpa [#allocation6], 0
    %13 = vsyncpa [#allocation4], 0
    // Predicated region
    $region2: #{tpu_custom_call.1} parent=1 // pred_check
      _
    $region3: #{tpu_custom_call.1} parent=1 // pred_check_branch
      %15 = sbr.rel (0) target = $region5
    $region4: #{tpu_custom_call.1} parent=1 // pred_region
      %17 = vsyncadd [#allocation3], 0
      %s18 = sshll.u32 %s0, 4
      %s19 = int_to_ptr.hbm [resolvable:$true] %s18
      %s20 = sshll.u32 [#allocation2], 4
      %s21 = int_to_ptr.vmem [resolvable:$true] %s20
      %26 = dma.hbm_to_vmem [thread:$0]  %s19, 512, %s21, [#allocation3], 128, 128, 8
    $region5: #{tpu_custom_call.1} parent=1 // pred_fallthru
      _
    // Predicated region
    $region6: #{tpu_custom_call.1} parent=1 // pred_check
      _
    $region7: #{tpu_custom_call.1} parent=1 // pred_check_branch
      %28 = sbr.rel (0) target = $region9
    $region8: #{tpu_custom_call.1} parent=1 // pred_region
      %30 = vsyncadd [#allocation6], 0
      %s31 = sshll.u32 %s1, 4
      %s32 = int_to_ptr.hbm [resolvable:$true] %s31
      %s33 = sshll.u32 [#allocation5], 4
      %s34 = int_to_ptr.vmem [resolvable:$true] %s33
      %39 = dma.hbm_to_vmem [thread:$0]  %s32, 3072, %s34, [#allocation6], 64, 64, 4
    $region9: #{tpu_custom_call.1} parent=1 // pred_fallthru
      _
    // Predicated region
    $region10: #{tpu_custom_call.1} parent=1 // pred_check
      _
    $region11: #{tpu_custom_call.1} parent=1 // pred_check_branch
      %41 = sbr.rel (0) target = $region13
    $region12: #{tpu_custom_call.1} parent=1 // pred_region
      %43 = vsyncadd [#allocation6], 0
      %s44 = sshll.u32 %s2, 4
      %s45 = int_to_ptr.hbm [resolvable:$true] %s44
      %s46 = sshll.u32 [#allocation7], 4
      %s47 = int_to_ptr.vmem [resolvable:$true] %s46
      %52 = dma.hbm_to_vmem [thread:$0]  %s45, 3072, %s47, [#allocation6], 64, 64, 4
    $region13: #{tpu_custom_call.1} parent=1 // pred_fallthru
      _
    // Predicated region
    $region14: #{tpu_custom_call.1} parent=1 // pred_check
      _
    $region15: #{tpu_custom_call.1} parent=1 // pred_check_branch
      %54 = sbr.rel (0) target = $region17
    $region16: #{tpu_custom_call.1} parent=1 // pred_region
      _
    $region17: #{tpu_custom_call.1} parent=1 // pred_fallthru
      _
    // Predicated region
    $region18: #{tpu_custom_call.1} parent=1 // pred_check
      _
    $region19: #{tpu_custom_call.1} parent=1 // pred_check_branch
      %56 = sbr.rel (0) target = $region21
    $region20: #{tpu_custom_call.1} parent=1 // pred_region
      _
    $region21: #{tpu_custom_call.1} parent=1 // pred_fallthru
      _
    // Predicated region
    $region22: #{tpu_custom_call.1} parent=1 // pred_check
      _
    $region23: #{tpu_custom_call.1} parent=1 // pred_check_branch
      %58 = sbr.rel (0) target = $region25
    $region24: #{tpu_custom_call.1} parent=1 // pred_region
      _
    $region25: #{tpu_custom_call.1} parent=1 // pred_fallthru
      _
    // Predicated region
    $region26: #{tpu_custom_call.1} parent=1 // pred_check
      _
    $region27: #{tpu_custom_call.1} parent=1 // pred_check_branch
      %60 = sbr.rel (0) target = $region29
    $region28: #{tpu_custom_call.1} parent=1 // pred_region
      %62 = dma.done [#allocation3], 512
    $region29: #{tpu_custom_call.1} parent=1 // pred_fallthru
      _
    // Predicated region
    $region30: #{tpu_custom_call.1} parent=1 // pred_check
      _
    $region31: #{tpu_custom_call.1} parent=1 // pred_check_branch
      %64 = sbr.rel (0) target = $region33
    $region32: #{tpu_custom_call.1} parent=1 // pred_region
      %66 = dma.done [#allocation6], 3072
    $region33: #{tpu_custom_call.1} parent=1 // pred_fallthru
      _
    // Predicated region
    $region34: #{tpu_custom_call.1} parent=1 // pred_check
      _
    $region35: #{tpu_custom_call.1} parent=1 // pred_check_branch
      %68 = sbr.rel (0) target = $region37
    $region36: #{tpu_custom_call.1} parent=1 // pred_region
      %70 = dma.done [#allocation6], 3072
    $region37: #{tpu_custom_call.1} parent=1 // pred_fallthru
      _
    %v71 = vld [vmem:[#allocation2] sm:$0xff]
    %v72 = vld [vmem:[#allocation2 + $0x8] sm:$0xff]
    %v73 = vld [vmem:[#allocation2 + $0x10] sm:$0xff]
    %v74 = vld [vmem:[#allocation2 + $0x18] sm:$0xff]
    %v75 = vlaneseq
    %v76 = vshrl.u32 %v75, 7
    %v77 = vadd.s32 %v76, 8
    %v78 = vadd.s32 %v76, 16
    %v79 = vadd.s32 %v76, 24
    %vm80 = vcmp.lt.s32.totalorder %v76, 0
    %v81 = vsub.s32 0, %v76
    %v82 = vsel %vm80, %v81, %v76
    %v83 = vshrl.u32 %v82, 4
    %v84 = vand.u32 %v82, 15
    %v85 = vsub.s32 0, %v84
    %v86 = vsel %vm80, %v85, %v84
    %vm87 = vcmp.lt.s32.totalorder %v77, 0
    %v88 = vsub.s32 0, %v77
    %v89 = vsel %vm87, %v88, %v77
    %v90 = vshrl.u32 %v89, 4
    %v91 = vand.u32 %v89, 15
    %v92 = vsub.s32 0, %v91
    %v93 = vsel %vm87, %v92, %v91
    %vm94 = vcmp.lt.s32.totalorder %v78, 0
    %v95 = vsub.s32 0, %v78
    %v96 = vsel %vm94, %v95, %v78
    %v97 = vshrl.u32 %v96, 4
    %v98 = vand.u32 %v96, 15
    %v99 = vsub.s32 0, %v98
    %v100 = vsel %vm94, %v99, %v98
    %vm101 = vcmp.lt.s32.totalorder %v79, 0
    %v102 = vsub.s32 0, %v79
    %v103 = vsel %vm101, %v102, %v79
    %v104 = vshrl.u32 %v103, 4
    %v105 = vand.u32 %v103, 15
    %v106 = vsub.s32 0, %v105
    %v107 = vsel %vm101, %v106, %v105
    %vm108 = vcmp.ne.s32.totalorder %v86, 0
    %vm109 = vcmp.ne.s32.totalorder %v93, 0
    %vm110 = vcmp.ne.s32.totalorder %v100, 0
    %vm111 = vcmp.ne.s32.totalorder %v107, 0
    %vm112 = vcmp.lt.s32.totalorder %v86, 0
    %vm113 = vcmp.lt.s32.totalorder %v93, 0
    %vm114 = vcmp.lt.s32.totalorder %v100, 0
    %vm115 = vcmp.lt.s32.totalorder %v107, 0
    %vm116 = vmand %vm112, %vm108
    %vm117 = vmand %vm113, %vm109
    %vm118 = vmand %vm114, %vm110
    %vm119 = vmand %vm115, %vm111
    %v120 = vadd.s32 %v86, 16
    %v121 = vadd.s32 %v93, 16
    %v122 = vadd.s32 %v100, 16
    %v123 = vadd.s32 %v107, 16
    %v124 = vsel %vm116, %v120, %v86
    %v125 = vsel %vm117, %v121, %v93
    %v126 = vsel %vm118, %v122, %v100
    %v127 = vsel %vm119, %v123, %v107
    %vm128 = vcmp.eq.s32.totalorder %v124, 0
    %vm129 = vcmp.eq.s32.totalorder %v125, 0
    %vm130 = vcmp.eq.s32.totalorder %v126, 0
    %vm131 = vcmp.eq.s32.totalorder %v127, 0
    %vm132 = vcmp.eq.s32.totalorder %v124, 15
    %vm133 = vcmp.eq.s32.totalorder %v125, 15
    %vm134 = vcmp.eq.s32.totalorder %v126, 15
    %vm135 = vcmp.eq.s32.totalorder %v127, 15
    %v136 = vrot.slane %v71, 7
    %v137 = vrot.slane %v72, 7
    %v138 = vrot.slane %v73, 7
    %v139 = vrot.slane %v74, 7
    %vm140 = vcmp.lt.s32.totalorder %v76, 1
    %v141 = vsel %vm140, %v138, %v139
    %v142 = vsel %vm140, %v137, %v138
    %v143 = vsel %vm140, %v136, %v137
    %v144 = vsel %vm140, %v139, %v136
    %v145 = vsel %vm128, 0.0, %v144
    %v146 = vsel %vm129, 0.0, %v143
    %v147 = vsel %vm130, 0.0, %v142
    %v148 = vsel %vm131, 0.0, %v141
    %v149 = vrot.slane %v71, 1
    %v150 = vrot.slane %v72, 1
    %v151 = vrot.slane %v73, 1
    %v152 = vrot.slane %v74, 1
    %vm153 = vcmp.lt.s32.totalorder %v76, 7
    %v154 = vsel %vm153, %v151, %v152
    %v155 = vsel %vm153, %v150, %v151
    %v156 = vsel %vm153, %v149, %v150
    %v157 = vsel %vm153, %v152, %v149
    %v158 = vsel %vm132, 0.0, %v156
    %v159 = vsel %vm133, 0.0, %v155
    %v160 = vsel %vm134, 0.0, %v154
    %v161 = vsel %vm135, 0.0, %v157
    %v162 = vpack.c.bf16 %v146, %v145
    %v163 = vpack.c.bf16 %v72, %v71
    %v164 = vpack.c.bf16 %v159, %v158
    %v165 = vpack.c.bf16 %v148, %v147
    %v166 = vpack.c.bf16 %v74, %v73
    %v167 = vpack.c.bf16 %v161, %v160
    %v168 = vld [vmem:[#allocation5] sm:$0xf]
    %v169 = vld [vmem:[#allocation5 + $0x4] sm:$0xf]
    %v170 = vld [vmem:[#allocation5 + $0x8] sm:$0xf]
    %v171 = vld [vmem:[#allocation5 + $0xc] sm:$0xf]
    %v172 = vld [vmem:[#allocation5 + $0x10] sm:$0xf]
    %v173 = vld [vmem:[#allocation5 + $0x14] sm:$0xf]
    %v174 = vld [vmem:[#allocation5 + $0x18] sm:$0xf]
    %v175 = vld [vmem:[#allocation5 + $0x1c] sm:$0xf]
    %v176 = vld [vmem:[#allocation5 + $0x20] sm:$0xf]
    %v177 = vld [vmem:[#allocation5 + $0x24] sm:$0xf]
    %v178 = vld [vmem:[#allocation5 + $0x28] sm:$0xf]
    %v179 = vld [vmem:[#allocation5 + $0x2c] sm:$0xf]
    %v180 = vld [vmem:[#allocation5 + $0x30] sm:$0xf]
    %v181 = vld [vmem:[#allocation5 + $0x34] sm:$0xf]
    %v182 = vld [vmem:[#allocation5 + $0x38] sm:$0xf]
    %v183 = vld [vmem:[#allocation5 + $0x3c] sm:$0xf]
    %v184 = vld [vmem:[#allocation5 + $0x40] sm:$0xf]
    %v185 = vld [vmem:[#allocation5 + $0x44] sm:$0xf]
    %v186 = vld [vmem:[#allocation5 + $0x48] sm:$0xf]
    %v187 = vld [vmem:[#allocation5 + $0x4c] sm:$0xf]
    %v188 = vld [vmem:[#allocation5 + $0x50] sm:$0xf]
    %v189 = vld [vmem:[#allocation5 + $0x54] sm:$0xf]
    %v190 = vld [vmem:[#allocation5 + $0x58] sm:$0xf]
    %v191 = vld [vmem:[#allocation5 + $0x5c] sm:$0xf]
    %v192 = vld [vmem:[#allocation5 + $0x60] sm:$0xf]
    %v193 = vld [vmem:[#allocation5 + $0x64] sm:$0xf]
    %v194 = vld [vmem:[#allocation5 + $0x68] sm:$0xf]
    %v195 = vld [vmem:[#allocation5 + $0x6c] sm:$0xf]
    %v196 = vld [vmem:[#allocation5 + $0x70] sm:$0xf]
    %v197 = vld [vmem:[#allocation5 + $0x74] sm:$0xf]
    %v198 = vld [vmem:[#allocation5 + $0x78] sm:$0xf]
    %v199 = vld [vmem:[#allocation5 + $0x7c] sm:$0xf]
    %v200 = vld [vmem:[#allocation5 + $0x80] sm:$0xf]
    %v201 = vld [vmem:[#allocation5 + $0x84] sm:$0xf]
    %v202 = vld [vmem:[#allocation5 + $0x88] sm:$0xf]
    %v203 = vld [vmem:[#allocation5 + $0x8c] sm:$0xf]
    %v204 = vld [vmem:[#allocation5 + $0x90] sm:$0xf]
    %v205 = vld [vmem:[#allocation5 + $0x94] sm:$0xf]
    %v206 = vld [vmem:[#allocation5 + $0x98] sm:$0xf]
    %v207 = vld [vmem:[#allocation5 + $0x9c] sm:$0xf]
    %v208 = vld [vmem:[#allocation5 + $0xa0] sm:$0xf]
    %v209 = vld [vmem:[#allocation5 + $0xa4] sm:$0xf]
    %v210 = vld [vmem:[#allocation5 + $0xa8] sm:$0xf]
    %v211 = vld [vmem:[#allocation5 + $0xac] sm:$0xf]
    %v212 = vld [vmem:[#allocation5 + $0xb0] sm:$0xf]
    %v213 = vld [vmem:[#allocation5 + $0xb4] sm:$0xf]
    %v214 = vld [vmem:[#allocation5 + $0xb8] sm:$0xf]
    %v215 = vld [vmem:[#allocation5 + $0xbc] sm:$0xf]
    %v216 = vld [vmem:[%s3] sm:$0x1]
    %v218 = vperm.slane %v216, 0
    %v268 = vunpack.c.l.b16 %v168
    %v269 = vunpack.c.l.b16 %v169
    %v270 = vunpack.c.l.b16 %v170
    %v271 = vunpack.c.l.b16 %v171
    %v272 = vunpack.c.l.b16 %v172
    %v273 = vunpack.c.l.b16 %v173
    %v274 = vunpack.c.l.b16 %v174
    %v275 = vunpack.c.l.b16 %v175
    %v276 = vunpack.c.l.b16 %v176
    %v277 = vunpack.c.l.b16 %v177
    %v278 = vunpack.c.l.b16 %v178
    %v279 = vunpack.c.l.b16 %v179
    %v280 = vunpack.c.l.b16 %v180
    %v281 = vunpack.c.l.b16 %v181
    %v282 = vunpack.c.l.b16 %v182
    %v283 = vunpack.c.l.b16 %v183
    %v284 = vunpack.c.l.b16 %v184
    %v285 = vunpack.c.l.b16 %v185
    %v286 = vunpack.c.l.b16 %v186
    %v287 = vunpack.c.l.b16 %v187
    %v288 = vunpack.c.l.b16 %v188
    %v289 = vunpack.c.l.b16 %v189
    %v290 = vunpack.c.l.b16 %v190
    %v291 = vunpack.c.l.b16 %v191
    %v292 = vunpack.c.l.b16 %v192
    %v293 = vunpack.c.l.b16 %v193
    %v294 = vunpack.c.l.b16 %v194
    %v295 = vunpack.c.l.b16 %v195
    %v296 = vunpack.c.l.b16 %v196
    %v297 = vunpack.c.l.b16 %v197
    %v298 = vunpack.c.l.b16 %v198
    %v299 = vunpack.c.l.b16 %v199
    %v300 = vunpack.c.l.b16 %v200
    %v301 = vunpack.c.l.b16 %v201
    %v302 = vunpack.c.l.b16 %v202
    %v303 = vunpack.c.l.b16 %v203
    %v304 = vunpack.c.l.b16 %v204
    %v305 = vunpack.c.l.b16 %v205
    %v306 = vunpack.c.l.b16 %v206
    %v307 = vunpack.c.l.b16 %v207
    %v308 = vunpack.c.l.b16 %v208
    %v309 = vunpack.c.l.b16 %v209
    %v310 = vunpack.c.l.b16 %v210
    %v311 = vunpack.c.l.b16 %v211
    %v312 = vunpack.c.l.b16 %v212
    %v313 = vunpack.c.l.b16 %v213
    %v314 = vunpack.c.l.b16 %v214
    %v315 = vunpack.c.l.b16 %v215
    %v316 = vpack.c.b16 %v269, %v268
    %v317 = vpack.c.b16 %v271, %v270
    %v318 = vpack.c.b16 %v273, %v272
    %v319 = vpack.c.b16 %v275, %v274
    %v320 = vpack.c.b16 %v277, %v276
    %v321 = vpack.c.b16 %v279, %v278
    %v322 = vpack.c.b16 %v281, %v280
    %v323 = vpack.c.b16 %v283, %v282
    %v324 = vpack.c.b16 %v285, %v284
    %v325 = vpack.c.b16 %v287, %v286
    %v326 = vpack.c.b16 %v289, %v288
    %v327 = vpack.c.b16 %v291, %v290
    %v328 = vpack.c.b16 %v293, %v292
    %v329 = vpack.c.b16 %v295, %v294
    %v330 = vpack.c.b16 %v297, %v296
    %v331 = vpack.c.b16 %v299, %v298
    %v332 = vpack.c.b16 %v301, %v300
    %v333 = vpack.c.b16 %v303, %v302
    %v334 = vpack.c.b16 %v305, %v304
    %v335 = vpack.c.b16 %v307, %v306
    %v336 = vpack.c.b16 %v309, %v308
    %v337 = vpack.c.b16 %v311, %v310
    %v338 = vpack.c.b16 %v313, %v312
    %v339 = vpack.c.b16 %v315, %v314
    %364 = vmatpush.bf16.msra.mxu0 %v323
    %365 = vmatpush.bf16.msra.mxu0 %v322
    %366 = vmatpush.bf16.msra.mxu0 %v321
    %367 = vmatpush.bf16.msra.mxu0 %v320
    %368 = vmatpush.bf16.msra.mxu0 %v319
    %369 = vmatpush.bf16.msra.mxu0 %v318
    %370 = vmatpush.bf16.msra.mxu0 %v317
    %371 = vmatpush.bf16.msra.mxu0 %v316
    %372 = vmatmul.bf16.gmra.mxu0 %v162
    %v373 = vpop.f32.mrf.mxu0
    %v374 = vadd.f32 %v218, %v373
    %v375 = vpop.f32.mrf.mxu0
    %v376 = vadd.f32 %v218, %v375
    %377 = vmatmul.bf16.gmra.mxu0 %v165
    %v378 = vpop.f32.mrf.mxu0
    %v379 = vadd.f32 %v218, %v378
    %v380 = vpop.f32.mrf.mxu0
    %v381 = vadd.f32 %v218, %v380
    %382 = vdwg.mxu0
    %383 = vmatpush.bf16.msra.mxu0 %v331
    %384 = vmatpush.bf16.msra.mxu0 %v330
    %385 = vmatpush.bf16.msra.mxu0 %v329
    %386 = vmatpush.bf16.msra.mxu0 %v328
    %387 = vmatpush.bf16.msra.mxu0 %v327
    %388 = vmatpush.bf16.msra.mxu0 %v326
    %389 = vmatpush.bf16.msra.mxu0 %v325
    %390 = vmatpush.bf16.msra.mxu0 %v324
    %391 = vmatmul.bf16.gmra.mxu0 %v163
    %v392 = vpop.f32.mrf.mxu0
    %v393 = vadd.f32 %v374, %v392
    %v394 = vpop.f32.mrf.mxu0
    %v395 = vadd.f32 %v376, %v394
    %396 = vmatmul.bf16.gmra.mxu0 %v166
    %v397 = vpop.f32.mrf.mxu0
    %v398 = vadd.f32 %v379, %v397
    %v399 = vpop.f32.mrf.mxu0
    %v400 = vadd.f32 %v381, %v399
    %401 = vdwg.mxu0
    %402 = vmatpush.bf16.msra.mxu0 %v339
    %403 = vmatpush.bf16.msra.mxu0 %v338
    %404 = vmatpush.bf16.msra.mxu0 %v337
    %405 = vmatpush.bf16.msra.mxu0 %v336
    %406 = vmatpush.bf16.msra.mxu0 %v335
    %407 = vmatpush.bf16.msra.mxu0 %v334
    %408 = vmatpush.bf16.msra.mxu0 %v333
    %409 = vmatpush.bf16.msra.mxu0 %v332
    %410 = vmatmul.bf16.gmra.mxu0 %v164
    %v411 = vpop.f32.mrf.mxu0
    %v412 = vadd.f32 %v393, %v411
    %v413 = vpop.f32.mrf.mxu0
    %v414 = vadd.f32 %v395, %v413
    %415 = vmatmul.bf16.gmra.mxu0 %v167
    %v416 = vpop.f32.mrf.mxu0
    %v417 = vadd.f32 %v398, %v416
    %v418 = vpop.f32.mrf.mxu0
    %v419 = vadd.f32 %v400, %v418
    %420 = vdwg.mxu0
    %v421 = vmax.f32 %v412, 0.0
    %v422 = vmax.f32 %v414, 0.0
    %v423 = vmax.f32 %v417, 0.0
    %v424 = vmax.f32 %v419, 0.0
    %v425 = vrot.slane %v421, 7
    %v426 = vrot.slane %v422, 7
    %v427 = vrot.slane %v423, 7
    %v428 = vrot.slane %v424, 7
    %v429 = vsel %vm140, %v427, %v428
    %v430 = vsel %vm140, %v426, %v427
    %v431 = vsel %vm140, %v425, %v426
    %v432 = vsel %vm140, %v428, %v425
    %v433 = vsel %vm128, 0.0, %v432
    %v434 = vsel %vm129, 0.0, %v431
    %v435 = vsel %vm130, 0.0, %v430
    %v436 = vsel %vm131, 0.0, %v429
    %v437 = vrot.slane %v421, 1
    %v438 = vrot.slane %v422, 1
    %v439 = vrot.slane %v423, 1
    %v440 = vrot.slane %v424, 1
    %v441 = vsel %vm153, %v439, %v440
    %v442 = vsel %vm153, %v438, %v439
    %v443 = vsel %vm153, %v437, %v438
    %v444 = vsel %vm153, %v440, %v437
    %v445 = vsel %vm132, 0.0, %v443
    %v446 = vsel %vm133, 0.0, %v442
    %v447 = vsel %vm134, 0.0, %v441
    %v448 = vsel %vm135, 0.0, %v444
    %v449 = vpack.c.bf16 %v434, %v433
    %v450 = vpack.c.bf16 %v422, %v421
    %v451 = vpack.c.bf16 %v446, %v445
    %v452 = vpack.c.bf16 %v436, %v435
    %v453 = vpack.c.bf16 %v424, %v423
    %v454 = vpack.c.bf16 %v448, %v447
    %v455 = vld [vmem:[#allocation7] sm:$0xf]
    %v456 = vld [vmem:[#allocation7 + $0x4] sm:$0xf]
    %v457 = vld [vmem:[#allocation7 + $0x8] sm:$0xf]
    %v458 = vld [vmem:[#allocation7 + $0xc] sm:$0xf]
    %v459 = vld [vmem:[#allocation7 + $0x10] sm:$0xf]
    %v460 = vld [vmem:[#allocation7 + $0x14] sm:$0xf]
    %v461 = vld [vmem:[#allocation7 + $0x18] sm:$0xf]
    %v462 = vld [vmem:[#allocation7 + $0x1c] sm:$0xf]
    %v463 = vld [vmem:[#allocation7 + $0x20] sm:$0xf]
    %v464 = vld [vmem:[#allocation7 + $0x24] sm:$0xf]
    %v465 = vld [vmem:[#allocation7 + $0x28] sm:$0xf]
    %v466 = vld [vmem:[#allocation7 + $0x2c] sm:$0xf]
    %v467 = vld [vmem:[#allocation7 + $0x30] sm:$0xf]
    %v468 = vld [vmem:[#allocation7 + $0x34] sm:$0xf]
    %v469 = vld [vmem:[#allocation7 + $0x38] sm:$0xf]
    %v470 = vld [vmem:[#allocation7 + $0x3c] sm:$0xf]
    %v471 = vld [vmem:[#allocation7 + $0x40] sm:$0xf]
    %v472 = vld [vmem:[#allocation7 + $0x44] sm:$0xf]
    %v473 = vld [vmem:[#allocation7 + $0x48] sm:$0xf]
    %v474 = vld [vmem:[#allocation7 + $0x4c] sm:$0xf]
    %v475 = vld [vmem:[#allocation7 + $0x50] sm:$0xf]
    %v476 = vld [vmem:[#allocation7 + $0x54] sm:$0xf]
    %v477 = vld [vmem:[#allocation7 + $0x58] sm:$0xf]
    %v478 = vld [vmem:[#allocation7 + $0x5c] sm:$0xf]
    %v479 = vld [vmem:[#allocation7 + $0x60] sm:$0xf]
    %v480 = vld [vmem:[#allocation7 + $0x64] sm:$0xf]
    %v481 = vld [vmem:[#allocation7 + $0x68] sm:$0xf]
    %v482 = vld [vmem:[#allocation7 + $0x6c] sm:$0xf]
    %v483 = vld [vmem:[#allocation7 + $0x70] sm:$0xf]
    %v484 = vld [vmem:[#allocation7 + $0x74] sm:$0xf]
    %v485 = vld [vmem:[#allocation7 + $0x78] sm:$0xf]
    %v486 = vld [vmem:[#allocation7 + $0x7c] sm:$0xf]
    %v487 = vld [vmem:[#allocation7 + $0x80] sm:$0xf]
    %v488 = vld [vmem:[#allocation7 + $0x84] sm:$0xf]
    %v489 = vld [vmem:[#allocation7 + $0x88] sm:$0xf]
    %v490 = vld [vmem:[#allocation7 + $0x8c] sm:$0xf]
    %v491 = vld [vmem:[#allocation7 + $0x90] sm:$0xf]
    %v492 = vld [vmem:[#allocation7 + $0x94] sm:$0xf]
    %v493 = vld [vmem:[#allocation7 + $0x98] sm:$0xf]
    %v494 = vld [vmem:[#allocation7 + $0x9c] sm:$0xf]
    %v495 = vld [vmem:[#allocation7 + $0xa0] sm:$0xf]
    %v496 = vld [vmem:[#allocation7 + $0xa4] sm:$0xf]
    %v497 = vld [vmem:[#allocation7 + $0xa8] sm:$0xf]
    %v498 = vld [vmem:[#allocation7 + $0xac] sm:$0xf]
    %v499 = vld [vmem:[#allocation7 + $0xb0] sm:$0xf]
    %v500 = vld [vmem:[#allocation7 + $0xb4] sm:$0xf]
    %v501 = vld [vmem:[#allocation7 + $0xb8] sm:$0xf]
    %v502 = vld [vmem:[#allocation7 + $0xbc] sm:$0xf]
    %v551 = vunpack.c.l.b16 %v455
    %v552 = vunpack.c.l.b16 %v456
    %v553 = vunpack.c.l.b16 %v457
    %v554 = vunpack.c.l.b16 %v458
    %v555 = vunpack.c.l.b16 %v459
    %v556 = vunpack.c.l.b16 %v460
    %v557 = vunpack.c.l.b16 %v461
    %v558 = vunpack.c.l.b16 %v462
    %v559 = vunpack.c.l.b16 %v463
    %v560 = vunpack.c.l.b16 %v464
    %v561 = vunpack.c.l.b16 %v465
    %v562 = vunpack.c.l.b16 %v466
    %v563 = vunpack.c.l.b16 %v467
    %v564 = vunpack.c.l.b16 %v468
    %v565 = vunpack.c.l.b16 %v469
    %v566 = vunpack.c.l.b16 %v470
    %v567 = vunpack.c.l.b16 %v471
    %v568 = vunpack.c.l.b16 %v472
    %v569 = vunpack.c.l.b16 %v473
    %v570 = vunpack.c.l.b16 %v474
    %v571 = vunpack.c.l.b16 %v475
    %v572 = vunpack.c.l.b16 %v476
    %v573 = vunpack.c.l.b16 %v477
    %v574 = vunpack.c.l.b16 %v478
    %v575 = vunpack.c.l.b16 %v479
    %v576 = vunpack.c.l.b16 %v480
    %v577 = vunpack.c.l.b16 %v481
    %v578 = vunpack.c.l.b16 %v482
    %v579 = vunpack.c.l.b16 %v483
    %v580 = vunpack.c.l.b16 %v484
    %v581 = vunpack.c.l.b16 %v485
    %v582 = vunpack.c.l.b16 %v486
    %v583 = vunpack.c.l.b16 %v487
    %v584 = vunpack.c.l.b16 %v488
    %v585 = vunpack.c.l.b16 %v489
    %v586 = vunpack.c.l.b16 %v490
    %v587 = vunpack.c.l.b16 %v491
    %v588 = vunpack.c.l.b16 %v492
    %v589 = vunpack.c.l.b16 %v493
    %v590 = vunpack.c.l.b16 %v494
    %v591 = vunpack.c.l.b16 %v495
    %v592 = vunpack.c.l.b16 %v496
    %v593 = vunpack.c.l.b16 %v497
    %v594 = vunpack.c.l.b16 %v498
    %v595 = vunpack.c.l.b16 %v499
    %v596 = vunpack.c.l.b16 %v500
    %v597 = vunpack.c.l.b16 %v501
    %v598 = vunpack.c.l.b16 %v502
    %v599 = vpack.c.b16 %v552, %v551
    %v600 = vpack.c.b16 %v554, %v553
    %v601 = vpack.c.b16 %v556, %v555
    %v602 = vpack.c.b16 %v558, %v557
    %v603 = vpack.c.b16 %v560, %v559
    %v604 = vpack.c.b16 %v562, %v561
    %v605 = vpack.c.b16 %v564, %v563
    %v606 = vpack.c.b16 %v566, %v565
    %v607 = vpack.c.b16 %v568, %v567
    %v608 = vpack.c.b16 %v570, %v569
    %v609 = vpack.c.b16 %v572, %v571
    %v610 = vpack.c.b16 %v574, %v573
    %v611 = vpack.c.b16 %v576, %v575
    %v612 = vpack.c.b16 %v578, %v577
    %v613 = vpack.c.b16 %v580, %v579
    %v614 = vpack.c.b16 %v582, %v581
    %v615 = vpack.c.b16 %v584, %v583
    %v616 = vpack.c.b16 %v586, %v585
    %v617 = vpack.c.b16 %v588, %v587
    %v618 = vpack.c.b16 %v590, %v589
    %v619 = vpack.c.b16 %v592, %v591
    %v620 = vpack.c.b16 %v594, %v593
    %v621 = vpack.c.b16 %v596, %v595
    %v622 = vpack.c.b16 %v598, %v597
    %647 = vmatpush.bf16.msra.mxu0 %v606
    %648 = vmatpush.bf16.msra.mxu0 %v605
    %649 = vmatpush.bf16.msra.mxu0 %v604
    %650 = vmatpush.bf16.msra.mxu0 %v603
    %651 = vmatpush.bf16.msra.mxu0 %v602
    %652 = vmatpush.bf16.msra.mxu0 %v601
    %653 = vmatpush.bf16.msra.mxu0 %v600
    %654 = vmatpush.bf16.msra.mxu0 %v599
    %655 = vmatmul.bf16.gmra.mxu0 %v449
    %v656 = vpop.f32.mrf.mxu0
    %v657 = vadd.f32 0.0, %v656
    %v658 = vpop.f32.mrf.mxu0
    %v659 = vadd.f32 0.0, %v658
    %660 = vmatmul.bf16.gmra.mxu0 %v452
    %v661 = vpop.f32.mrf.mxu0
    %v662 = vadd.f32 0.0, %v661
    %v663 = vpop.f32.mrf.mxu0
    %v664 = vadd.f32 0.0, %v663
    %665 = vdwg.mxu0
    %666 = vmatpush.bf16.msra.mxu0 %v614
    %667 = vmatpush.bf16.msra.mxu0 %v613
    %668 = vmatpush.bf16.msra.mxu0 %v612
    %669 = vmatpush.bf16.msra.mxu0 %v611
    %670 = vmatpush.bf16.msra.mxu0 %v610
    %671 = vmatpush.bf16.msra.mxu0 %v609
    %672 = vmatpush.bf16.msra.mxu0 %v608
    %673 = vmatpush.bf16.msra.mxu0 %v607
    %674 = vmatmul.bf16.gmra.mxu0 %v450
    %v675 = vpop.f32.mrf.mxu0
    %v676 = vadd.f32 %v657, %v675
    %v677 = vpop.f32.mrf.mxu0
    %v678 = vadd.f32 %v659, %v677
    %679 = vmatmul.bf16.gmra.mxu0 %v453
    %v680 = vpop.f32.mrf.mxu0
    %v681 = vadd.f32 %v662, %v680
    %v682 = vpop.f32.mrf.mxu0
    %v683 = vadd.f32 %v664, %v682
    %684 = vdwg.mxu0
    %685 = vmatpush.bf16.msra.mxu0 %v622
    %686 = vmatpush.bf16.msra.mxu0 %v621
    %687 = vmatpush.bf16.msra.mxu0 %v620
    %688 = vmatpush.bf16.msra.mxu0 %v619
    %689 = vmatpush.bf16.msra.mxu0 %v618
    %690 = vmatpush.bf16.msra.mxu0 %v617
    %691 = vmatpush.bf16.msra.mxu0 %v616
    %692 = vmatpush.bf16.msra.mxu0 %v615
    %693 = vmatmul.bf16.gmra.mxu0 %v451
    %v694 = vpop.f32.mrf.mxu0
    %v695 = vadd.f32 %v676, %v694
    %v696 = vpop.f32.mrf.mxu0
    %v697 = vadd.f32 %v678, %v696
    %698 = vmatmul.bf16.gmra.mxu0 %v454
    %v699 = vpop.f32.mrf.mxu0
    %v700 = vadd.f32 %v681, %v699
    %v701 = vpop.f32.mrf.mxu0
    %v702 = vadd.f32 %v683, %v701
    %703 = vdwg.mxu0
    %v704 = vld [vmem:[%s4] sm:$0x1]
    %v706 = vperm.slane %v704, 0
    %v708 = vmul.f32 %v695, %v706
    %v709 = vmul.f32 %v697, %v706
    %v710 = vmul.f32 %v700, %v706
    %v711 = vmul.f32 %v702, %v706
    %v712 = vadd.f32 %v71, %v708
    %v713 = vadd.f32 %v72, %v709
    %v714 = vadd.f32 %v73, %v710
    %v715 = vadd.f32 %v74, %v711
    %v716 = vld [vmem:[%s5] sm:$0x1]
    %v718 = vperm.slane %v716, 0
    %v720 = vadd.f32 %v712, %v718
    %v721 = vadd.f32 %v713, %v718
    %v722 = vadd.f32 %v714, %v718
    %v723 = vadd.f32 %v715, %v718
    %724 = vst [vmem:[#allocation8] sm:$0xff] %v720
    %725 = vst [vmem:[#allocation8 + $0x8] sm:$0xff] %v721
    %726 = vst [vmem:[#allocation8 + $0x10] sm:$0xff] %v722
    %727 = vst [vmem:[#allocation8 + $0x18] sm:$0xff] %v723
    // Predicated region
    $region38: #{tpu_custom_call.1} parent=1 // pred_check
      _
    $region39: #{tpu_custom_call.1} parent=1 // pred_check_branch
      %729 = sbr.rel (0) target = $region41
    $region40: #{tpu_custom_call.1} parent=1 // pred_region
      %731 = vsyncadd [#allocation4], 0
      %s732 = sshll.u32 [#allocation8], 4
      %s733 = int_to_ptr.vmem [resolvable:$true] %s732
      %s734 = sshll.u32 %s6, 4
      %s735 = int_to_ptr.hbm [resolvable:$true] %s734
      %740 = dma.vmem_to_hbm [thread:$0]  %s733, 512, %s735, [#allocation4], 128, 128, 8
    $region41: #{tpu_custom_call.1} parent=1 // pred_fallthru
      _
    // Predicated region
    $region42: #{tpu_custom_call.1} parent=1 // pred_check
      _
    $region43: #{tpu_custom_call.1} parent=1 // pred_check_branch
      %742 = sbr.rel (0) target = $region45
    $region44: #{tpu_custom_call.1} parent=1 // pred_region
      %744 = dma.done [#allocation4], 512
    $region45: #{tpu_custom_call.1} parent=1 // pred_fallthru
      _
    %745 = vsyncpa [#allocation3], 1
    %746 = vsyncpa [#allocation6], 1
    %747 = vsyncpa [#allocation4], 1

</llo_original>
